<compile_context>
chip_gen: v7x
topology: tpu7x:2x2x1
jax: 0.10.0
libtpu: 0.0.40
codegen_flags: <defaults>
</compile_context>

<pallas_src>
import functools

import jax
import jax.numpy as jnp
from jax.experimental import pallas as pl
from jax.experimental.pallas import tpu as pltpu


def _layernorm_kernel(x_ref, gamma_ref, beta_ref, o_ref, *, eps: float, inv_hidden: float):
    # x_ref: (tile_rows, hidden); gamma_ref/beta_ref: (1, hidden)
    x = x_ref[...].astype(jnp.float32)
    ones_col = jnp.ones((x.shape[-1], 1), dtype=jnp.float32)

    # Row sums on the MXU (vector-extended slot) instead of XLU lane-reduces.
    # Two-pass centered form: numerically robust to large-mean inputs.
    mean = jnp.dot(x, ones_col, preferred_element_type=jnp.float32) * inv_hidden
    xc = x - mean                                                   # centered, reused
    var = jnp.dot(xc * xc, ones_col, preferred_element_type=jnp.float32) * inv_hidden
    inv_std = jax.lax.rsqrt(var + eps)                              # EUP rsqrt, no divide

    g = gamma_ref[...].astype(jnp.float32)
    b = beta_ref[...].astype(jnp.float32)
    # gamma * (xc * inv_std) + beta  ==  xc * (gamma * inv_std) + beta
    o_ref[...] = (xc * (g * inv_std) + b).astype(o_ref.dtype)


def _round_up(x: int, m: int) -> int:
    return ((x + m - 1) // m) * m


def _vmem_capacity_bytes() -> int:
    # Conservative fallback (v7x per-TC VMEM) if the query is unavailable.
    try:
        return int(pltpu.get_tpu_info().vmem_capacity_bytes)
    except Exception:
        return 64 * 1024 * 1024


def _choose_tile_rows(rows: int, hidden: int, itemsize: int, vmem_bytes: int) -> int:
    # Sublane packing: f32 -> 8 rows/vreg, bf16 -> 16, int8/fp8 -> 32.
    base = {4: 8, 2: 16, 1: 32}.get(itemsize, 8)

    # VMEM budget per row: 2x input + 2x output double-buffered DMA tiles at the
    # input precision, plus ~3 f32 in-kernel temporaries (x32, xc, scaled out).
    bytes_per_row = 4 * hidden * itemsize + 3 * hidden * 4
    frac = 0.30 if vmem_bytes <= (64 << 20) else 0.45   # tighter on v7x (64 MiB/TC)
    budget = int(vmem_bytes * frac)
    vmem_rows = max(base, (budget // max(bytes_per_row, 1)) // base * base)

    # Bytes-based tile target: ~4 MiB input tile keeps us on the HBM roofline
    # regardless of hidden size / precision (replaces the fixed 2048-row cap).
    target_tile_bytes = 4 << 20
    bytes_rows = max(base, (target_tile_bytes // max(hidden * itemsize, 1)) // base * base)

    # Keep >= ~4 grid steps so a megacore 'parallel' row axis has work per TC.
    rows_cap = max(base, _round_up(pl.cdiv(rows, 4), base))

    tile_rows = max(base, min(vmem_rows, bytes_rows, rows_cap))

    # Prefer an even number of grid steps (v7x megacore: avoid one-core tail).
    steps = pl.cdiv(rows, tile_rows)
    if steps > 1 and steps % 2 == 1:
        alt = max(base, _round_up(pl.cdiv(rows, steps + 1), base))
        if pl.cdiv(rows, alt) % 2 == 0:
            tile_rows = alt
    return tile_rows


def layer_normalisation(x, gamma, beta, *, eps: float = 1e-5, tile_rows: int | None = None):
    """LayerNorm over the last dim of x. x: (..., hidden); gamma/beta: (hidden,)."""
    orig_shape = x.shape
    hidden = orig_shape[-1]
    rows = 1
    for d in orig_shape[:-1]:
        rows *= d

    x2d = x.reshape(rows, hidden)
    gamma2d = gamma.reshape(1, hidden)
    beta2d = beta.reshape(1, hidden)

    itemsize = jnp.dtype(x.dtype).itemsize
    vmem_bytes = _vmem_capacity_bytes()
    if tile_rows is None:
        tile_rows = _choose_tile_rows(rows, hidden, itemsize, vmem_bytes)

    # Ragged rows: no wrapper-side pad/slice. Pallas masks the boundary tile's
    # out-of-range stores, and rows are independent, so garbage in the padded
    # sublanes of the last input tile cannot affect valid rows.
    grid = (pl.cdiv(rows, tile_rows),)

    # Scoped-VMEM limit: DMA tiles + explicit f32 scratch estimate + margin,
    # capped below the physical capacity of this generation.
    dma_bytes = 4 * tile_rows * hidden * itemsize          # double-buffered in/out
    scratch_f32 = 3 * tile_rows * hidden * 4                # in-kernel f32 temporaries
    param_bytes = 4 * hidden * max(itemsize, 4)             # gamma/beta (double-buffered)
    vmem_limit = dma_bytes + scratch_f32 + param_bytes + (4 << 20)
    vmem_limit = min(vmem_limit, vmem_bytes - (8 << 20))
    vmem_limit = max(vmem_limit, 16 << 20)

    kernel = functools.partial(_layernorm_kernel, eps=eps, inv_hidden=1.0 / hidden)

    out2d = pl.pallas_call(
        kernel,
        out_shape=jax.ShapeDtypeStruct((rows, hidden), x.dtype),
        grid_spec=pltpu.PrefetchScalarGridSpec(
            num_scalar_prefetch=0,
            grid=grid,
            in_specs=[
                pl.BlockSpec((tile_rows, hidden), lambda i: (i, 0)),
                pl.BlockSpec((1, hidden), lambda i: (0, 0)),
                pl.BlockSpec((1, hidden), lambda i: (0, 0)),
            ],
            out_specs=pl.BlockSpec((tile_rows, hidden), lambda i: (i, 0)),
        ),
        compiler_params=pltpu.CompilerParams(
            dimension_semantics=("parallel",),
            vmem_limit_bytes=int(vmem_limit),
        ),
    )(x2d, gamma2d, beta2d)

    return out2d.reshape(orig_shape)


def _reference(x, gamma, beta, eps=1e-5):
    x32 = x.astype(jnp.float32)
    mean = jnp.mean(x32, axis=-1, keepdims=True)
    var = jnp.mean((x32 - mean) ** 2, axis=-1, keepdims=True)
    std = jnp.sqrt(var + eps)
    y = (x32 - mean) / std
    return (gamma * y + beta).astype(x.dtype)


if __name__ == "__main__":
    eps = 1e-5
    key = jax.random.PRNGKey(0)

    # Case 1: module-default init (gamma=ones, beta=zeros), lane-dense hidden.
    batch, seq, hidden = 2, 8, 128
    k1, k2, k3, k4 = jax.random.split(key, 4)
    x = jax.random.normal(k1, (batch, seq, hidden), dtype=jnp.float32)
    gamma = jnp.ones((hidden,), dtype=jnp.float32)
    beta = jnp.zeros((hidden,), dtype=jnp.float32)

    out = jax.block_until_ready(layer_normalisation(x, gamma, beta, eps=eps))
    ref = _reference(x, gamma, beta, eps=eps)
    assert out.shape == x.shape
    assert jnp.allclose(out, ref, atol=1e-5, rtol=1e-5), "mismatch vs reference (case 1)"

    # Case 2: ragged row count (15 rows, not a multiple of the 8-row tile)
    # exercises the pad-free boundary-masked path, plus learned affine params.
    b2, s2, h2 = 3, 5, 128
    x2 = jax.random.normal(k2, (b2, s2, h2), dtype=jnp.float32) * 3.0 + 2.0
    gamma2 = jax.random.normal(k3, (h2,), dtype=jnp.float32)
    beta2 = jax.random.normal(k4, (h2,), dtype=jnp.float32)

    out2 = jax.block_until_ready(layer_normalisation(x2, gamma2, beta2, eps=eps))
    ref2 = _reference(x2, gamma2, beta2, eps=eps)
    assert out2.shape == x2.shape
    assert jnp.allclose(out2, ref2, atol=1e-5, rtol=1e-5), "mismatch vs reference (case 2)"

    print("KERNEL_OK")
</pallas_src>

<mosaic_0001>
module attributes {stable_mosaic.version = 11 : i64} {
  func.func @_layernorm_kernel(%arg0: i32, %arg1: memref<8x128xf32, #tpu.memory_space<vmem>>, %arg2: memref<1x128xf32, #tpu.memory_space<vmem>>, %arg3: memref<1x128xf32, #tpu.memory_space<vmem>>, %arg4: memref<8x128xf32, #tpu.memory_space<vmem>>) attributes {dimension_semantics = [#tpu.dimension_semantics<parallel>], iteration_bounds = array<i64: 2>, scalar_prefetch = 0 : i64, scratch_operands = 0 : i64, tpu.core_type = #tpu.core_type<tc>, window_params = [{transform_indices = @transform_0, window_bounds = array<i64: 8, 128>}, {pipeline_mode = #tpu.pipeline_mode<synchronous>, transform_indices = @transform_1, window_bounds = array<i64: 1, 128>}, {pipeline_mode = #tpu.pipeline_mode<synchronous>, transform_indices = @transform_2, window_bounds = array<i64: 1, 128>}, {transform_indices = @transform_3, window_bounds = array<i64: 8, 128>}]} {
    %c0 = arith.constant 0 : index
    %c0_0 = arith.constant 0 : index
    %0 = vector.load %arg1[%c0, %c0_0] : memref<8x128xf32, #tpu.memory_space<vmem>>, vector<8x128xf32>
    %cst = arith.constant 1.000000e+00 : f32
    %1 = vector.broadcast %cst : f32 to vector<128x1xf32>
    %cst_1 = arith.constant dense<0.000000e+00> : vector<8x1xf32>
    %2 = tpu.matmul %0, %1, %cst_1 {dimension_numbers = #tpu.dot_dimension_numbers<[1], [0], [0], [1], [0, 0, 1, 1], [], []>} : vector<8x128xf32>, vector<128x1xf32>, vector<8x1xf32> -> vector<8x1xf32>
    %cst_2 = arith.constant 7.812500e-03 : f32
    %3 = vector.broadcast %cst_2 : f32 to vector<8x1xf32>
    %4 = arith.mulf %2, %3 : vector<8x1xf32>
    %5 = vector.broadcast %4 : vector<8x1xf32> to vector<8x128xf32>
    %6 = arith.subf %0, %5 : vector<8x128xf32>
    %7 = arith.mulf %6, %6 : vector<8x128xf32>
    %cst_3 = arith.constant dense<0.000000e+00> : vector<8x1xf32>
    %8 = tpu.matmul %7, %1, %cst_3 {dimension_numbers = #tpu.dot_dimension_numbers<[1], [0], [0], [1], [0, 0, 1, 1], [], []>} : vector<8x128xf32>, vector<128x1xf32>, vector<8x1xf32> -> vector<8x1xf32>
    %cst_4 = arith.constant 7.812500e-03 : f32
    %9 = vector.broadcast %cst_4 : f32 to vector<8x1xf32>
    %10 = arith.mulf %8, %9 : vector<8x1xf32>
    %cst_5 = arith.constant 9.99999974E-6 : f32
    %11 = vector.broadcast %cst_5 : f32 to vector<8x1xf32>
    %12 = arith.addf %10, %11 : vector<8x1xf32>
    %13 = math.rsqrt %12 : vector<8x1xf32>
    %c0_6 = arith.constant 0 : index
    %c0_7 = arith.constant 0 : index
    %14 = vector.load %arg2[%c0_6, %c0_7] : memref<1x128xf32, #tpu.memory_space<vmem>>, vector<1x128xf32>
    %c0_8 = arith.constant 0 : index
    %c0_9 = arith.constant 0 : index
    %15 = vector.load %arg3[%c0_8, %c0_9] : memref<1x128xf32, #tpu.memory_space<vmem>>, vector<1x128xf32>
    %16 = vector.broadcast %14 : vector<1x128xf32> to vector<8x128xf32>
    %17 = vector.broadcast %13 : vector<8x1xf32> to vector<8x128xf32>
    %18 = arith.mulf %16, %17 : vector<8x128xf32>
    %19 = arith.mulf %6, %18 : vector<8x128xf32>
    %20 = vector.broadcast %15 : vector<1x128xf32> to vector<8x128xf32>
    %21 = arith.addf %19, %20 : vector<8x128xf32>
    %c0_10 = arith.constant 0 : index
    %c0_11 = arith.constant 0 : index
    %22 = vector.load %arg4[%c0_10, %c0_11] : memref<8x128xf32, #tpu.memory_space<vmem>>, vector<8x128xf32>
    tpu.vector_store %arg4[%c0_10, %c0_11], %21 {strides = array<i32>} : memref<8x128xf32, #tpu.memory_space<vmem>>, vector<8x128xf32>,
    return
  }
  func.func @transform_0(%arg0: i32) -> (i32, i32) {
    %c0_i32 = arith.constant 0 : i32
    %c0_i32_0 = arith.constant 0 : i32
    return %arg0, %c0_i32 : i32, i32
  }
  func.func @transform_1(%arg0: i32) -> (i32, i32) {
    %c0_i32 = arith.constant 0 : i32
    %c0_i32_0 = arith.constant 0 : i32
    %c0_i32_1 = arith.constant 0 : i32
    return %c0_i32, %c0_i32_0 : i32, i32
  }
  func.func @transform_2(%arg0: i32) -> (i32, i32) {
    %c0_i32 = arith.constant 0 : i32
    %c0_i32_0 = arith.constant 0 : i32
    %c0_i32_1 = arith.constant 0 : i32
    return %c0_i32, %c0_i32_0 : i32, i32
  }
  func.func @transform_3(%arg0: i32) -> (i32, i32) {
    %c0_i32 = arith.constant 0 : i32
    %c0_i32_0 = arith.constant 0 : i32
    return %arg0, %c0_i32 : i32, i32
  }
}

</mosaic_0001>

<llo_original>
// kernel: tpu_custom_call.1
$region0: #{tpu_custom_call.1}
  #allocation0 [shape = 'u32[]', space=smem, size = 0x4, offset = 0x4, fixed_abs, tag = 'smem constant byte address 0x4 - core index']
  #allocation1 [shape = 'u32[144,128]{1,0:T(1,128)}', space=vmem, size = 0x12000, scoped, tag = 'internal scratch']
  %s0 = inlined_call_operand.hbm [shape: f32[16,128], index: 0, kind: input, shape index: {}]
  %s1 = inlined_call_operand.vmem [shape: f32[1,128], index: 1, kind: input, shape index: {}]
  %s2 = inlined_call_operand.vmem [shape: f32[1,128], index: 2, kind: input, shape index: {}]
  %s3 = inlined_call_operand.hbm [shape: f32[16,128], index: 3, kind: output, shape index: {}]
  %s4 = sld [smem:[#allocation0]]
  $region49: #{tpu_custom_call.1} parent=0
    _
  %s6 = ssub.s32 1, %s4
  %s7 = scalar_select 0, %s6, %s4
  $region1: #{tpu_custom_call.1} parent=0
    #allocation2 [shape = 'u8[8192]{0}', space=vmem, size = 0x2000, scoped, tag = 'input window, operand 0']
    #allocation3 [shape = 's32[2]{0}', space=sflag, size = 0x8, scoped, tag = 'scoped memory for tpu_custom_call.1']
    #allocation4 [shape = 's32[2]{0}', space=sflag, size = 0x8, scoped, tag = 'scoped memory for tpu_custom_call.1']
    #allocation5 [shape = 'u8[8192]{0}', space=vmem, size = 0x2000, scoped, tag = 'output window, operand 0']
    %8 = vsyncpa [#allocation3], 0
    %s9 = scalar_lea.sflag [#allocation3], 1
    %10 = vsyncpa %s9, 0
    %11 = vsyncpa [#allocation4], 0
    %s12 = scalar_lea.sflag [#allocation4], 1
    %13 = vsyncpa %s12, 0
    loop: start=0, step=1, limit=4
    $region2: #{tpu_custom_call.1} parent=1 // loop_pre_header
      _
    $region3: #{tpu_custom_call.1} parent=1 // loop_header
      %s15 = sphi 0, %s19
      %p16 = scmp.ge.s32.totalorder %s15, 4
      %s25 = sphi 0, %s27
      %s28 = sphi 0, %s25
      %s29 = sphi 0, %s28
      %s45 = sphi 0, %s29
      %s49 = sphi 0, %s49
      %s51 = sphi 0, %s49
      %s52 = sphi 0, %s51
      %s66 = sphi 0, %s52
      %s70 = sphi 0, %s70
      %s72 = sphi 0, %s70
      %s73 = sphi 0, %s72
      %s87 = sphi 0, %s73
      %s93 = sphi 0, %s95
      %s96 = sphi 0, %s93
      %s97 = sphi 0, %s96
      %s113 = sphi 0, %s97
    $region4: #{tpu_custom_call.1} parent=1 // loop_header_branch
      %18 = sbr.rel (%p16) target = $region8
    $region5: #{tpu_custom_call.1} parent=1 // loop_body
      %s20 = ssub.s32 %s15, 1
      %s21 = ssub.s32 %s15, 2
      %s22 = sadd.s32 %s15, 1
      %s23 = ssub.s32 %s15, %s22
      %p24 = scmp.eq.s32.totalorder %s23, 0
      %s26 = sadd.s32 %s25, 1
      %s27 = scalar_select %p24, %s25, %s26
      %p30 = pneg %p24
      %p31 = scmp.eq.s32.totalorder %s15, 1
      %p32 = por %p30, %p31
      %p33 = scmp.ne.s32.totalorder %s25, %s28
      %p34 = scmp.eq.s32.totalorder %s15, 0
      %p35 = por %p33, %p34
      %p36 = scmp.ne.s32.totalorder %s25, %s28
      %p37 = scmp.eq.s32.totalorder %s20, 1
      %p38 = por %p36, %p37
      %p39 = scmp.ne.s32.totalorder %s28, %s29
      %p40 = scmp.eq.s32.totalorder %s20, 0
      %p41 = por %p39, %p40
      %p42 = scmp.ne.s32.totalorder %s28, %s29
      %p43 = scmp.eq.s32.totalorder %s21, 1
      %p44 = por %p42, %p43
      %p46 = scmp.ne.s32.totalorder %s29, %s45
      %p47 = scmp.eq.s32.totalorder %s21, 0
      %p48 = por %p46, %p47
      %s50 = sadd.s32 %s49, 1
      %p53 = scmp.eq.s32.totalorder %s15, 1
      %p54 = scmp.ne.s32.totalorder %s49, %s51
      %p55 = scmp.eq.s32.totalorder %s15, 0
      %p56 = por %p54, %p55
      %p57 = scmp.ne.s32.totalorder %s49, %s51
      %p58 = scmp.eq.s32.totalorder %s20, 1
      %p59 = por %p57, %p58
      %p60 = scmp.ne.s32.totalorder %s51, %s52
      %p61 = scmp.eq.s32.totalorder %s20, 0
      %p62 = por %p60, %p61
      %p63 = scmp.ne.s32.totalorder %s51, %s52
      %p64 = scmp.eq.s32.totalorder %s21, 1
      %p65 = por %p63, %p64
      %p67 = scmp.ne.s32.totalorder %s52, %s66
      %p68 = scmp.eq.s32.totalorder %s21, 0
      %p69 = por %p67, %p68
      %s71 = sadd.s32 %s70, 1
      %p74 = scmp.eq.s32.totalorder %s15, 1
      %p75 = scmp.ne.s32.totalorder %s70, %s72
      %p76 = scmp.eq.s32.totalorder %s15, 0
      %p77 = por %p75, %p76
      %p78 = scmp.ne.s32.totalorder %s70, %s72
      %p79 = scmp.eq.s32.totalorder %s20, 1
      %p80 = por %p78, %p79
      %p81 = scmp.ne.s32.totalorder %s72, %s73
      %p82 = scmp.eq.s32.totalorder %s20, 0
      %p83 = por %p81, %p82
      %p84 = scmp.ne.s32.totalorder %s72, %s73
      %p85 = scmp.eq.s32.totalorder %s21, 1
      %p86 = por %p84, %p85
      %p88 = scmp.ne.s32.totalorder %s73, %s87
      %p89 = scmp.eq.s32.totalorder %s21, 0
      %p90 = por %p88, %p89
      %s91 = ssub.s32 %s15, %s22
      %p92 = scmp.eq.s32.totalorder %s91, 0
      %s94 = sadd.s32 %s93, 1
      %s95 = scalar_select %p92, %s93, %s94
      %p98 = pneg %p92
      %p99 = scmp.eq.s32.totalorder %s15, 1
      %p100 = por %p98, %p99
      %p101 = scmp.ne.s32.totalorder %s93, %s96
      %p102 = scmp.eq.s32.totalorder %s15, 0
      %p103 = por %p101, %p102
      %p104 = scmp.ne.s32.totalorder %s93, %s96
      %p105 = scmp.eq.s32.totalorder %s20, 1
      %p106 = por %p104, %p105
      %p107 = scmp.ne.s32.totalorder %s96, %s97
      %p108 = scmp.eq.s32.totalorder %s20, 0
      %p109 = por %p107, %p108
      %p110 = scmp.ne.s32.totalorder %s96, %s97
      %p111 = scmp.eq.s32.totalorder %s21, 1
      %p112 = por %p110, %p111
      %p114 = scmp.ne.s32.totalorder %s97, %s113
      %p115 = scmp.eq.s32.totalorder %s21, 0
      %p116 = por %p114, %p115
      %p117 = scmp.le.s32.totalorder 1, %s15
      %p118 = scmp.lt.s32.totalorder %s15, 3
      %p119 = pnand %p117, %p118
      %p120 = pneg %p119
      // Predicated region
      $region9: #{tpu_custom_call.1} parent=5 // pred_check
        _
      $region10: #{tpu_custom_call.1} parent=5 // pred_check_branch
        %122 = sbr.rel (%p119) target = $region12
      $region11: #{tpu_custom_call.1} parent=5 // pred_region
        %s123 = ssub.s32 %s15, 1
        // Predicated region
        $region13: #{tpu_custom_call.1} parent=11 // pred_check
          %p124 = pneg %p62
        $region14: #{tpu_custom_call.1} parent=11 // pred_check_branch
          %126 = sbr.rel (%p124) target = $region16
        $region15: #{tpu_custom_call.1} parent=11 // pred_region
          _
        $region16: #{tpu_custom_call.1} parent=11 // pred_fallthru
          _
        // Predicated region
        $region17: #{tpu_custom_call.1} parent=11 // pred_check
          %p127 = pneg %p83
        $region18: #{tpu_custom_call.1} parent=11 // pred_check_branch
          %129 = sbr.rel (%p127) target = $region20
        $region19: #{tpu_custom_call.1} parent=11 // pred_region
          _
        $region20: #{tpu_custom_call.1} parent=11 // pred_fallthru
          _
      $region12: #{tpu_custom_call.1} parent=5 // pred_fallthru
        _
      %p130 = scmp.lt.s32.totalorder %s15, 2
      // Predicated region
      $region21: #{tpu_custom_call.1} parent=5 // pred_check
        %p131 = pneg %p130
      $region22: #{tpu_custom_call.1} parent=5 // pred_check_branch
        %133 = sbr.rel (%p131) target = $region24
      $region23: #{tpu_custom_call.1} parent=5 // pred_region
        // Predicated region
        $region25: #{tpu_custom_call.1} parent=23 // pred_check
          %p134 = pneg %p35
        $region26: #{tpu_custom_call.1} parent=23 // pred_check_branch
          %136 = sbr.rel (%p134) target = $region28
        $region27: #{tpu_custom_call.1} parent=23 // pred_region
          %s137 = sand.u32 %s25, 1
          %s138 = scalar_lea.sflag [#allocation3], %s137
          %s139 = sand.u32 %s25, 1
          %s140 = smul.addr %s139, 8
          %s141 = scalar_lea.vmem [#allocation2], %s140
          %s143 = ssub.s32 128, 128
          %144 = vsyncadd %s138, %s143
          %s145 = smul.addr %s15, 128
          %s146 = scalar_lea.hbm %s0, %s145
          %s148 = sshll.u32 %s141, 4
          %s149 = int_to_ptr.vmem [resolvable:$true] %s148
          %151 = dma.hbm_to_vmem [thread:$0]  %s146, 128, %s149, %s138
        $region28: #{tpu_custom_call.1} parent=23 // pred_fallthru
          _
      $region24: #{tpu_custom_call.1} parent=5 // pred_fallthru
        _
      %p152 = scmp.le.s32.totalorder 1, %s15
      %p153 = scmp.lt.s32.totalorder %s15, 3
      %p154 = pnand %p152, %p153
      %p155 = pneg %p154
      // Predicated region
      $region29: #{tpu_custom_call.1} parent=5 // pred_check
        _
      $region30: #{tpu_custom_call.1} parent=5 // pred_check_branch
        %157 = sbr.rel (%p154) target = $region32
      $region31: #{tpu_custom_call.1} parent=5 // pred_region
        %s158 = ssub.s32 %s15, 1
        %s159 = sand.u32 %s28, 1
        %s160 = scalar_lea.sflag [#allocation3], %s159
        %s161 = sand.u32 %s28, 1
        %s162 = smul.addr %s161, 8
        %s163 = scalar_lea.vmem [#allocation2], %s162
        // Predicated region
        $region33: #{tpu_custom_call.1} parent=31 // pred_check
          %p164 = pneg %p41
        $region34: #{tpu_custom_call.1} parent=31 // pred_check_branch
          %166 = sbr.rel (%p164) target = $region36
        $region35: #{tpu_custom_call.1} parent=31 // pred_region
          %167 = dma.done %s160, 128
        $region36: #{tpu_custom_call.1} parent=31 // pred_fallthru
          _
        %s168 = sand.u32 %s28, 1
        %s169 = scalar_lea.sflag [#allocation3], %s168
        %s170 = sand.u32 %s28, 1
        %s171 = smul.addr %s170, 8
        %s172 = scalar_lea.vmem [#allocation2], %s171
        %p173 = pneg %p41
        %p174 = pneg %p38
        %p175 = pneg %p62
        %p176 = pneg %p59
        %p177 = pneg %p83
        %p178 = pneg %p80
        %p179 = pneg %p109
        %p180 = pneg %p106
        %s181 = sand.u32 %s96, 1
        %s182 = scalar_lea.sflag [#allocation4], %s181
        %s183 = sand.u32 %s96, 1
        %s184 = smul.addr %s183, 8
        %s185 = scalar_lea.vmem [#allocation5], %s184
        %v186 = vld [vmem:[%s163] sm:$0xff]
        %187 = vmatprep.subr.mxu0 0.0
        %188 = vmatpush1.msra.mxu0 1.0
        %189 = vmatprep.subr.mxu0 0.0
        %190 = vmatpush1.msra.mxu0 1.0
        %191 = vmatprep.subr.mxu0 0.0
        %192 = vmatpush1.msra.mxu0 1.0
        %193 = vmatprep.subr.mxu0 0.0
        %194 = vmatpush1.msra.mxu0 1.0
        %195 = vmatprep.subr.mxu0 0.0
        %196 = vmatpush1.msra.mxu0 1.0
        %197 = vmatprep.subr.mxu0 0.0
        %198 = vmatpush1.msra.mxu0 1.0
        %199 = vmatprep.subr.mxu0 0.0
        %200 = vmatpush1.msra.mxu0 1.0
        %201 = vmatprep.subr.mxu0 0.0
        %202 = vmatpush1.msra.mxu0 1.0
        %203 = vmatprep.subr.mxu0 0.0
        %204 = vmatpush1.msra.mxu0 1.0
        %205 = vmatprep.subr.mxu0 0.0
        %206 = vmatpush1.msra.mxu0 1.0
        %207 = vmatprep.subr.mxu0 0.0
        %208 = vmatpush1.msra.mxu0 1.0
        %209 = vmatprep.subr.mxu0 0.0
        %210 = vmatpush1.msra.mxu0 1.0
        %211 = vmatprep.subr.mxu0 0.0
        %212 = vmatpush1.msra.mxu0 1.0
        %213 = vmatprep.subr.mxu0 0.0
        %214 = vmatpush1.msra.mxu0 1.0
        %215 = vmatprep.subr.mxu0 0.0
        %216 = vmatpush1.msra.mxu0 1.0
        %217 = vmatprep.subr.mxu0 0.0
        %218 = vmatpush1.msra.mxu0 1.0
        %219 = vmatprep.subr.mxu0 0.0
        %220 = vmatpush1.msra.mxu0 0.0
        %221 = vmatprep.subr.mxu0 0.0
        %222 = vmatpush1.msra.mxu0 0.0
        %223 = vmatprep.subr.mxu0 0.0
        %224 = vmatpush1.msra.mxu0 0.0
        %225 = vmatprep.subr.mxu0 0.0
        %226 = vmatpush1.msra.mxu0 0.0
        %227 = vmatprep.subr.mxu0 0.0
        %228 = vmatpush1.msra.mxu0 0.0
        %229 = vmatprep.subr.mxu0 0.0
        %230 = vmatpush1.msra.mxu0 0.0
        %231 = vmatprep.subr.mxu0 0.0
        %232 = vmatpush1.msra.mxu0 0.0
        %233 = vmatprep.subr.mxu0 0.0
        %234 = vmatpush1.msra.mxu0 0.0
        %235 = vmatprep.subr.mxu0 0.0
        %236 = vmatpush1.msra.mxu0 0.0
        %237 = vmatprep.subr.mxu0 0.0
        %238 = vmatpush1.msra.mxu0 0.0
        %239 = vmatprep.subr.mxu0 0.0
        %240 = vmatpush1.msra.mxu0 0.0
        %241 = vmatprep.subr.mxu0 0.0
        %242 = vmatpush1.msra.mxu0 0.0
        %243 = vmatprep.subr.mxu0 0.0
        %244 = vmatpush1.msra.mxu0 0.0
        %245 = vmatprep.subr.mxu0 0.0
        %246 = vmatpush1.msra.mxu0 0.0
        %247 = vmatprep.subr.mxu0 0.0
        %248 = vmatpush1.msra.mxu0 0.0
        %249 = vmatprep.subr.mxu0 0.0
        %250 = vmatpush1.msra.mxu0 0.0
        %251 = vmatprep.mubr.f32.mxu0 0.0
        %252 = vmatmul.mubr.f32.gmra.mrb[0].mxu0 %v186
        %v253 = vpop.f32.mrb[0].mxu0
        %v254 = vadd.f32 0.0, %v253
        %v255 = vpop.f32.mrb[0].mxu0
        %256 = vdwg.mxu0
        %v257 = vmul.f32 %v254, 0.0078125
        %259 = vset.pattern.permute.xlu0 0
        %260 = vperm.xlu0 %259, %v257
        %v261 = vpop.permute.xlu0 %260
        %v263 = vsub.f32 %v186, %v261
        %v264 = vmul.f32 %v263, %v263
        %265 = vmatprep.subr.mxu0 0.0
        %266 = vmatpush1.msra.mxu0 1.0
        %267 = vmatprep.subr.mxu0 0.0
        %268 = vmatpush1.msra.mxu0 1.0
        %269 = vmatprep.subr.mxu0 0.0
        %270 = vmatpush1.msra.mxu0 1.0
        %271 = vmatprep.subr.mxu0 0.0
        %272 = vmatpush1.msra.mxu0 1.0
        %273 = vmatprep.subr.mxu0 0.0
        %274 = vmatpush1.msra.mxu0 1.0
        %275 = vmatprep.subr.mxu0 0.0
        %276 = vmatpush1.msra.mxu0 1.0
        %277 = vmatprep.subr.mxu0 0.0
        %278 = vmatpush1.msra.mxu0 1.0
        %279 = vmatprep.subr.mxu0 0.0
        %280 = vmatpush1.msra.mxu0 1.0
        %281 = vmatprep.subr.mxu0 0.0
        %282 = vmatpush1.msra.mxu0 1.0
        %283 = vmatprep.subr.mxu0 0.0
        %284 = vmatpush1.msra.mxu0 1.0
        %285 = vmatprep.subr.mxu0 0.0
        %286 = vmatpush1.msra.mxu0 1.0
        %287 = vmatprep.subr.mxu0 0.0
        %288 = vmatpush1.msra.mxu0 1.0
        %289 = vmatprep.subr.mxu0 0.0
        %290 = vmatpush1.msra.mxu0 1.0
        %291 = vmatprep.subr.mxu0 0.0
        %292 = vmatpush1.msra.mxu0 1.0
        %293 = vmatprep.subr.mxu0 0.0
        %294 = vmatpush1.msra.mxu0 1.0
        %295 = vmatprep.subr.mxu0 0.0
        %296 = vmatpush1.msra.mxu0 1.0
        %297 = vmatprep.subr.mxu0 0.0
        %298 = vmatpush1.msra.mxu0 0.0
        %299 = vmatprep.subr.mxu0 0.0
        %300 = vmatpush1.msra.mxu0 0.0
        %301 = vmatprep.subr.mxu0 0.0
        %302 = vmatpush1.msra.mxu0 0.0
        %303 = vmatprep.subr.mxu0 0.0
        %304 = vmatpush1.msra.mxu0 0.0
        %305 = vmatprep.subr.mxu0 0.0
        %306 = vmatpush1.msra.mxu0 0.0
        %307 = vmatprep.subr.mxu0 0.0
        %308 = vmatpush1.msra.mxu0 0.0
        %309 = vmatprep.subr.mxu0 0.0
        %310 = vmatpush1.msra.mxu0 0.0
        %311 = vmatprep.subr.mxu0 0.0
        %312 = vmatpush1.msra.mxu0 0.0
        %313 = vmatprep.subr.mxu0 0.0
        %314 = vmatpush1.msra.mxu0 0.0
        %315 = vmatprep.subr.mxu0 0.0
        %316 = vmatpush1.msra.mxu0 0.0
        %317 = vmatprep.subr.mxu0 0.0
        %318 = vmatpush1.msra.mxu0 0.0
        %319 = vmatprep.subr.mxu0 0.0
        %320 = vmatpush1.msra.mxu0 0.0
        %321 = vmatprep.subr.mxu0 0.0
        %322 = vmatpush1.msra.mxu0 0.0
        %323 = vmatprep.subr.mxu0 0.0
        %324 = vmatpush1.msra.mxu0 0.0
        %325 = vmatprep.subr.mxu0 0.0
        %326 = vmatpush1.msra.mxu0 0.0
        %327 = vmatprep.subr.mxu0 0.0
        %328 = vmatpush1.msra.mxu0 0.0
        %329 = vmatprep.mubr.f32.mxu0 0.0
        %330 = vmatmul.mubr.f32.gmra.mrb[0].mxu0 %v264
        %v331 = vpop.f32.mrb[0].mxu0
        %v332 = vadd.f32 0.0, %v331
        %v333 = vpop.f32.mrb[0].mxu0
        %334 = vdwg.mxu0
        %v335 = vmul.f32 %v332, 0.0078125
        %v336 = vadd.f32 %v335, 1e-05
        %v337 = vrsqrt.pop %v336
        %v338 = vld [vmem:[%s1] sm:$0x1]
        %v339 = vld [vmem:[%s2] sm:$0x1]
        %v341 = vlaneseq
        %v342 = vshrl.u32 %v341, 7
        %v343 = vsub.s32 0, %v342
        %v344 = vrot.slane %v338, %v343
        %347 = vset.pattern.permute.xlu0 0
        %348 = vperm.xlu0 %347, %v337
        %v349 = vpop.permute.xlu0 %348
        %v351 = vmul.f32 %v344, %v349
        %v352 = vmul.f32 %v263, %v351
        %v354 = vlaneseq
        %v355 = vshrl.u32 %v354, 7
        %v356 = vsub.s32 0, %v355
        %v357 = vrot.slane %v339, %v356
        %v359 = vadd.f32 %v352, %v357
        %360 = vst [vmem:[%s185] sm:$0xff] %v359
        %s361 = sand.u32 %s96, 1
        %s362 = scalar_lea.sflag [#allocation4], %s361
        %s363 = sand.u32 %s96, 1
        %s364 = smul.addr %s363, 8
        %s365 = scalar_lea.vmem [#allocation5], %s364
        // Predicated region
        $region37: #{tpu_custom_call.1} parent=31 // pred_check
          %p366 = pneg %p106
        $region38: #{tpu_custom_call.1} parent=31 // pred_check_branch
          %368 = sbr.rel (%p366) target = $region40
        $region39: #{tpu_custom_call.1} parent=31 // pred_region
          %s370 = ssub.s32 128, 128
          %371 = vsyncadd %s362, %s370
          %s372 = smul.addr %s20, 128
          %s373 = scalar_lea.hbm %s3, %s372
          %s375 = sshll.u32 %s365, 4
          %s376 = int_to_ptr.vmem [resolvable:$true] %s375
          %378 = dma.vmem_to_hbm [thread:$0]  %s376, 128, %s373, %s362
        $region40: #{tpu_custom_call.1} parent=31 // pred_fallthru
          _
      $region32: #{tpu_custom_call.1} parent=5 // pred_fallthru
        _
      %p379 = scmp.le.s32.totalorder 2, %s15
      // Predicated region
      $region41: #{tpu_custom_call.1} parent=5 // pred_check
        %p380 = pneg %p379
      $region42: #{tpu_custom_call.1} parent=5 // pred_check_branch
        %382 = sbr.rel (%p380) target = $region44
      $region43: #{tpu_custom_call.1} parent=5 // pred_region
        %s383 = ssub.s32 %s15, 2
        // Predicated region
        $region45: #{tpu_custom_call.1} parent=43 // pred_check
          %p384 = pneg %p112
        $region46: #{tpu_custom_call.1} parent=43 // pred_check_branch
          %386 = sbr.rel (%p384) target = $region48
        $region47: #{tpu_custom_call.1} parent=43 // pred_region
          %s387 = sand.u32 %s97, 1
          %s388 = scalar_lea.sflag [#allocation4], %s387
          %s389 = sand.u32 %s97, 1
          %s390 = smul.addr %s389, 8
          %s391 = scalar_lea.vmem [#allocation5], %s390
          %392 = dma.done %s388, 128
        $region48: #{tpu_custom_call.1} parent=43 // pred_fallthru
          _
      $region44: #{tpu_custom_call.1} parent=5 // pred_fallthru
        _
    $region6: #{tpu_custom_call.1} parent=1 // loop_footer
      %s19 = sadd.s32 1, %s15
    $region7: #{tpu_custom_call.1} parent=1 // loop_footer_branch
      %14 = sbr.rel target = $region3
    $region8: #{tpu_custom_call.1} parent=1 // loop_exit
      _
    %393 = vsyncpa [#allocation3], 1
    %s394 = scalar_lea.sflag [#allocation3], 1
    %395 = vsyncpa %s394, 1
    %396 = vsyncpa [#allocation4], 1
    %s397 = scalar_lea.sflag [#allocation4], 1
    %398 = vsyncpa %s397, 1

</llo_original>
